<compile_context>
chip_gen: v7x
topology: tpu7x:2x2x1
jax: 0.10.0
libtpu: 0.0.40
codegen_flags: <defaults>
</compile_context>

<pallas_src>
import functools
import math

import jax
import jax.numpy as jnp
from jax.experimental import pallas as pl
from jax.experimental.pallas import tpu as pltpu


def _attention_kernel(lat_ref, ctx_ref, wq_ref, bq_ref, wk_ref, bk_ref,
                      wv_ref, bv_ref, ot_ref, k_sc, v_sc, *, scale, approx_recip):
    """Fused per-(batch, q-tile): QKV projections + scaled softmax attention.

    K/V are projected once per batch (first q-tile) into persistent VMEM scratch.
    Emits the attention output TRANSPOSED, i.e. (P @ V)^T of shape (D, tq), so the
    PyTorch transpose(1,2).reshape scramble becomes a free reshape in the wrapper.
    """
    qi = pl.program_id(1)
    cdt = lat_ref.dtype            # MXU operand dtype; accumulation is always f32

    # --- K / V projections: once per batch, cached in VMEM scratch ---------------
    @pl.when(qi == 0)
    def _():
        ctx = ctx_ref[0]                                                 # (Skv, Dc)
        k_sc[...] = (jnp.dot(ctx, wk_ref[...], preferred_element_type=jnp.float32)
                     + bk_ref[...]).astype(cdt)                          # (Skv, D)
        v_sc[...] = (jnp.dot(ctx, wv_ref[...], preferred_element_type=jnp.float32)
                     + bv_ref[...]).astype(cdt)                          # (Skv, D)

    # --- Q projection for this q-tile --------------------------------------------
    lat = lat_ref[0]                                                     # (tq, D)
    q = (jnp.dot(lat, wq_ref[...], preferred_element_type=jnp.float32)
         + bq_ref[...]).astype(cdt)                                      # (tq, D)
    k = k_sc[...]                                                        # (Skv, D)
    v = v_sc[...]                                                        # (Skv, D)

    # --- scores + softmax, kept in f32 (v5e has no bf16 VPU/EUP) -----------------
    s = jax.lax.dot_general(q, k, (((1,), (1,)), ((), ())),
                            preferred_element_type=jnp.float32) * scale  # (tq, Skv)
    s = s - jnp.max(s, axis=-1, keepdims=True)
    p = jnp.exp(s)
    # normalisation via reciprocal (EUP slot) instead of a VALU divide
    p = p * pl.reciprocal(jnp.sum(p, axis=-1, keepdims=True), approx=approx_recip)

    # --- attention output, emitted transposed: (P @ V)^T = dot(V^T-contract, P) --
    ot = jax.lax.dot_general(v, p.astype(cdt), (((0,), (1,)), ((), ())),
                             preferred_element_type=jnp.float32)         # (D, tq)
    ot_ref[0] = ot.astype(ot_ref.dtype)


def _out_proj_kernel(x_ref, wo_ref, bo_ref, o_ref):
    """Row-tile output projection over the flattened (B*Sq, D) scrambled activations."""
    y = (jnp.dot(x_ref[...], wo_ref[...], preferred_element_type=jnp.float32)
         + bo_ref[...])
    o_ref[...] = y.astype(o_ref.dtype)


def _pick_tile(n, candidates):
    for t in candidates:
        if n % t == 0:
            return t
    return n


@functools.partial(jax.jit, static_argnums=(3,), static_argnames=("matmul_dtype",))
def cross_attention(latent, context, params, n_heads, *, matmul_dtype=jnp.float32):
    B, Sq, D = latent.shape
    _, Skv, Dc = context.shape
    d_head = D // n_heads
    scale = 1.0 / math.sqrt(d_head)

    cdt = jax.dtypes.canonicalize_dtype(matmul_dtype)
    approx = bool(cdt == jnp.bfloat16)

    # MXU operands in the compute dtype (bf16 on v6e/v7x halves weight/activation
    # traffic); biases stay f32 (added to the f32 accumulator).
    lat = latent.astype(cdt)
    ctx = context.astype(cdt)
    wq_t = params["wq"].T.astype(cdt)
    wk_t = params["wk"].T.astype(cdt)
    wv_t = params["wv"].T.astype(cdt)
    wo_t = params["wo"].T.astype(cdt)
    bq = params["bq"].reshape(1, D).astype(jnp.float32)
    bk = params["bk"].reshape(1, D).astype(jnp.float32)
    bv = params["bv"].reshape(1, D).astype(jnp.float32)
    bo = params["bo"].reshape(1, D).astype(jnp.float32)

    # Constant operands: whole array, staged once in VMEM, never double-buffered.
    vmem = pl.BlockSpec(memory_space=pltpu.MemorySpace.VMEM)

    # q-tile: full sequence for small Sq (the validated path); 128-aligned row tiles
    # for long sequences to keep activations / score matrices bounded in VMEM.
    tq = Sq if Sq <= 512 else _pick_tile(Sq, (512, 256, 128))
    nq = Sq // tq if Sq % tq == 0 else 1
    if nq * tq != Sq:          # fallback: no aligned tile divides Sq -> single block
        tq, nq = Sq, 1

    attn_params = pltpu.CompilerParams(
        dimension_semantics=("parallel", "arbitrary"),   # batch across v7x's 2 TCs
        vmem_limit_bytes=32 * 1024 * 1024,
    )

    # ---- call 1: fused QKV + softmax attention, emits transposed (B, D, Sq) ----
    attn_t = pl.pallas_call(
        functools.partial(_attention_kernel, scale=scale, approx_recip=approx),
        out_shape=jax.ShapeDtypeStruct((B, D, Sq), cdt),
        grid=(B, nq),
        in_specs=[
            pl.BlockSpec((1, tq, D), lambda b, q: (b, q, 0)),     # latent q-tile
            pl.BlockSpec((1, Skv, Dc), lambda b, q: (b, 0, 0)),   # context (reused)
            vmem, vmem,                                           # Wq^T, bq
            vmem, vmem,                                           # Wk^T, bk
            vmem, vmem,                                           # Wv^T, bv
        ],
        out_specs=pl.BlockSpec((1, D, tq), lambda b, q: (b, 0, q)),
        scratch_shapes=[
            pltpu.VMEM((Skv, D), cdt),                            # K cache (per batch)
            pltpu.VMEM((Skv, D), cdt),                            # V cache (per batch)
        ],
        compiler_params=attn_params,
    )(lat, ctx, wq_t, bq, wk_t, bk, wv_t, bv)

    # PyTorch's `output.transpose(1, 2).reshape(B, Sq, D)`: the transpose was already
    # materialised by the kernel, so the scramble is just a free row-major reshape
    # (no HBM copy, no standalone XLA transpose op).  Flatten batch into rows so the
    # out-projection is one dense GEMM (larger MXU M dimension).
    scrambled = attn_t.reshape(B * Sq, D)

    # ---- call 2: output projection over (B*Sq, D) rows --------------------------
    rows = B * Sq
    tile_m = _pick_tile(rows, (512, 256, 128, 64, 32, 16, 8))

    proj_params = pltpu.CompilerParams(
        dimension_semantics=("parallel",),
        vmem_limit_bytes=32 * 1024 * 1024,
    )
    out = pl.pallas_call(
        _out_proj_kernel,
        out_shape=jax.ShapeDtypeStruct((rows, D), latent.dtype),
        grid=(rows // tile_m,),
        in_specs=[
            pl.BlockSpec((tile_m, D), lambda i: (i, 0)),          # scrambled activations
            vmem, vmem,                                           # Wo^T, bo
        ],
        out_specs=pl.BlockSpec((tile_m, D), lambda i: (i, 0)),
        compiler_params=proj_params,
    )(scrambled, wo_t, bo)

    return out.reshape(B, Sq, D)


def _reference(latent, context, params, n_heads):
    """Plain-JAX reference mirroring the PyTorch forward exactly (f32)."""
    B, Sq, D = latent.shape
    d_head = D // n_heads
    q = latent @ params["wq"].T + params["bq"]
    k = context @ params["wk"].T + params["bk"]
    v = context @ params["wv"].T + params["bv"]
    w = jnp.einsum("bqd,bkd->bqk", q, k) / math.sqrt(d_head)
    w = jax.nn.softmax(w, axis=-1)
    o = w @ v
    o = jnp.transpose(o, (0, 2, 1)).reshape(B, Sq, D)
    return o @ params["wo"].T + params["bo"]


def _init_params(key, d_embed, d_cross):
    """Deterministic nn.Linear-style init: U(-1/sqrt(fan_in), 1/sqrt(fan_in))."""
    ks = jax.random.split(key, 8)

    def lin(wkey, bkey, out_f, in_f):
        bound = 1.0 / math.sqrt(in_f)
        w = jax.random.uniform(wkey, (out_f, in_f), jnp.float32, -bound, bound)
        b = jax.random.uniform(bkey, (out_f,), jnp.float32, -bound, bound)
        return w, b

    wq, bq = lin(ks[0], ks[1], d_embed, d_embed)
    wk, bk = lin(ks[2], ks[3], d_embed, d_cross)
    wv, bv = lin(ks[4], ks[5], d_embed, d_cross)
    wo, bo = lin(ks[6], ks[7], d_embed, d_embed)
    return dict(wq=wq, bq=bq, wk=wk, bk=bk, wv=wv, bv=bv, wo=wo, bo=bo)


if __name__ == "__main__":
    B, Sq, Skv = 2, 8, 8
    n_heads, d_embed, d_cross = 4, 32, 16

    key = jax.random.PRNGKey(0)
    k_lat, k_ctx, k_par = jax.random.split(key, 3)
    latent = jax.random.normal(k_lat, (B, Sq, d_embed), jnp.float32)
    context = jax.random.normal(k_ctx, (B, Skv, d_cross), jnp.float32)
    params = _init_params(k_par, d_embed, d_cross)

    ref = _reference(latent, context, params, n_heads)

    # Exact-precision path (f32 MXU operands): tight check vs. the reference.
    out = jax.block_until_ready(cross_attention(latent, context, params, n_heads))
    assert out.shape == (B, Sq, d_embed)
    assert jnp.allclose(out, ref, atol=1e-5, rtol=1e-5), "f32 kernel mismatch vs reference"

    # bf16 MXU-operand path (v6e/v7x optimization): f32 accumulation, f32 softmax,
    # validated at a bf16-appropriate tolerance.
    out_bf16 = jax.block_until_ready(
        cross_attention(latent, context, params, n_heads, matmul_dtype=jnp.bfloat16))
    assert out_bf16.shape == (B, Sq, d_embed)
    assert jnp.allclose(out_bf16, ref, atol=5e-2, rtol=5e-2), "bf16 kernel mismatch vs reference"

    print("KERNEL_OK")
</pallas_src>

<mosaic_0001>
module attributes {stable_mosaic.version = 11 : i64} {
  func.func @_out_proj_kernel(%arg0: i32, %arg1: memref<16x32xf32, #tpu.memory_space<vmem>>, %arg2: memref<32x32xf32, #tpu.memory_space<vmem>>, %arg3: memref<1x32xf32, #tpu.memory_space<vmem>>, %arg4: memref<16x32xf32, #tpu.memory_space<vmem>>) attributes {dimension_semantics = [#tpu.dimension_semantics<parallel>], iteration_bounds = array<i64: 1>, scalar_prefetch = 0 : i64, scratch_operands = 0 : i64, tpu.core_type = #tpu.core_type<tc>, window_params = [{transform_indices = @transform_0, window_bounds = array<i64: 16, 32>}, {pipeline_mode = #tpu.pipeline_mode<synchronous>, transform_indices = @transform_1, window_bounds = array<i64: 32, 32>}, {pipeline_mode = #tpu.pipeline_mode<synchronous>, transform_indices = @transform_2, window_bounds = array<i64: 1, 32>}, {transform_indices = @transform_3, window_bounds = array<i64: 16, 32>}]} {
    %c0 = arith.constant 0 : index
    %c0_0 = arith.constant 0 : index
    %0 = vector.load %arg1[%c0, %c0_0] : memref<16x32xf32, #tpu.memory_space<vmem>>, vector<16x32xf32>
    %c0_1 = arith.constant 0 : index
    %c0_2 = arith.constant 0 : index
    %1 = vector.load %arg2[%c0_1, %c0_2] : memref<32x32xf32, #tpu.memory_space<vmem>>, vector<32x32xf32>
    %cst = arith.constant dense<0.000000e+00> : vector<16x32xf32>
    %2 = tpu.matmul %0, %1, %cst {dimension_numbers = #tpu.dot_dimension_numbers<[1], [0], [0], [1], [0, 0, 1, 1], [], []>} : vector<16x32xf32>, vector<32x32xf32>, vector<16x32xf32> -> vector<16x32xf32>
    %c0_3 = arith.constant 0 : index
    %c0_4 = arith.constant 0 : index
    %3 = vector.load %arg3[%c0_3, %c0_4] : memref<1x32xf32, #tpu.memory_space<vmem>>, vector<1x32xf32>
    %4 = vector.broadcast %3 : vector<1x32xf32> to vector<16x32xf32>
    %5 = arith.addf %2, %4 : vector<16x32xf32>
    %c0_5 = arith.constant 0 : index
    %c0_6 = arith.constant 0 : index
    %6 = vector.load %arg4[%c0_5, %c0_6] : memref<16x32xf32, #tpu.memory_space<vmem>>, vector<16x32xf32>
    tpu.vector_store %arg4[%c0_5, %c0_6], %5 {strides = array<i32>} : memref<16x32xf32, #tpu.memory_space<vmem>>, vector<16x32xf32>,
    return
  }
  func.func @transform_0(%arg0: i32) -> (i32, i32) {
    %c0_i32 = arith.constant 0 : i32
    %c0_i32_0 = arith.constant 0 : i32
    return %arg0, %c0_i32 : i32, i32
  }
  func.func @transform_1(%arg0: i32) -> (i32, i32) {
    %c0_i32 = arith.constant 0 : i32
    %c0_i32_0 = arith.constant 0 : i32
    %c0_i32_1 = arith.constant 0 : i32
    return %c0_i32, %c0_i32_0 : i32, i32
  }
  func.func @transform_2(%arg0: i32) -> (i32, i32) {
    %c0_i32 = arith.constant 0 : i32
    %c0_i32_0 = arith.constant 0 : i32
    %c0_i32_1 = arith.constant 0 : i32
    return %c0_i32, %c0_i32_0 : i32, i32
  }
  func.func @transform_3(%arg0: i32) -> (i32, i32) {
    %c0_i32 = arith.constant 0 : i32
    %c0_i32_0 = arith.constant 0 : i32
    return %arg0, %c0_i32 : i32, i32
  }
}

module attributes {stable_mosaic.version = 11 : i64} {
  func.func @_attention_kernel(%arg0: i32, %arg1: i32, %arg2: memref<1x8x32xf32, #tpu.memory_space<vmem>>, %arg3: memref<1x8x16xf32, #tpu.memory_space<vmem>>, %arg4: memref<32x32xf32, #tpu.memory_space<vmem>>, %arg5: memref<1x32xf32, #tpu.memory_space<vmem>>, %arg6: memref<16x32xf32, #tpu.memory_space<vmem>>, %arg7: memref<1x32xf32, #tpu.memory_space<vmem>>, %arg8: memref<16x32xf32, #tpu.memory_space<vmem>>, %arg9: memref<1x32xf32, #tpu.memory_space<vmem>>, %arg10: memref<1x32x8xf32, #tpu.memory_space<vmem>>, %arg11: memref<8x32xf32, #tpu.memory_space<vmem>>, %arg12: memref<8x32xf32, #tpu.memory_space<vmem>>) attributes {dimension_semantics = [#tpu.dimension_semantics<parallel>, #tpu.dimension_semantics<arbitrary>], iteration_bounds = array<i64: 2, 1>, scalar_prefetch = 0 : i64, scratch_operands = 2 : i64, tpu.core_type = #tpu.core_type<tc>, window_params = [{transform_indices = @transform_0, window_bounds = array<i64: 1, 8, 32>}, {transform_indices = @transform_1, window_bounds = array<i64: 1, 8, 16>}, {pipeline_mode = #tpu.pipeline_mode<synchronous>, transform_indices = @transform_2, window_bounds = array<i64: 32, 32>}, {pipeline_mode = #tpu.pipeline_mode<synchronous>, transform_indices = @transform_3, window_bounds = array<i64: 1, 32>}, {pipeline_mode = #tpu.pipeline_mode<synchronous>, transform_indices = @transform_4, window_bounds = array<i64: 16, 32>}, {pipeline_mode = #tpu.pipeline_mode<synchronous>, transform_indices = @transform_5, window_bounds = array<i64: 1, 32>}, {pipeline_mode = #tpu.pipeline_mode<synchronous>, transform_indices = @transform_6, window_bounds = array<i64: 16, 32>}, {pipeline_mode = #tpu.pipeline_mode<synchronous>, transform_indices = @transform_7, window_bounds = array<i64: 1, 32>}, {transform_indices = @transform_8, window_bounds = array<i64: 1, 32, 8>}]} {
    %c0_i32 = arith.constant 0 : i32
    %0 = arith.cmpi eq, %arg1, %c0_i32 : i32
    %1 = arith.extui %0 : i1 to i32
    %c0_i32_0 = arith.constant 0 : i32
    %2 = arith.cmpi ne, %1, %c0_i32_0 : i32
    scf.if %2 {
      %c0_19 = arith.constant 0 : index
      %c0_20 = arith.constant 0 : index
      %c0_21 = arith.constant 0 : index
      %29 = vector.load %arg3[%c0_19, %c0_20, %c0_21] : memref<1x8x16xf32, #tpu.memory_space<vmem>>, vector<1x8x16xf32>
      %30 = vector.shape_cast %29 : vector<1x8x16xf32> to vector<8x16xf32>
      %c0_22 = arith.constant 0 : index
      %c0_23 = arith.constant 0 : index
      %31 = vector.load %arg6[%c0_22, %c0_23] : memref<16x32xf32, #tpu.memory_space<vmem>>, vector<16x32xf32>
      %cst_24 = arith.constant dense<0.000000e+00> : vector<8x32xf32>
      %32 = tpu.matmul %30, %31, %cst_24 {dimension_numbers = #tpu.dot_dimension_numbers<[1], [0], [0], [1], [0, 0, 1, 1], [], []>} : vector<8x16xf32>, vector<16x32xf32>, vector<8x32xf32> -> vector<8x32xf32>
      %c0_25 = arith.constant 0 : index
      %c0_26 = arith.constant 0 : index
      %33 = vector.load %arg7[%c0_25, %c0_26] : memref<1x32xf32, #tpu.memory_space<vmem>>, vector<1x32xf32>
      %34 = vector.broadcast %33 : vector<1x32xf32> to vector<8x32xf32>
      %35 = arith.addf %32, %34 : vector<8x32xf32>
      %c0_27 = arith.constant 0 : index
      %c0_28 = arith.constant 0 : index
      %36 = vector.load %arg11[%c0_27, %c0_28] : memref<8x32xf32, #tpu.memory_space<vmem>>, vector<8x32xf32>
      tpu.vector_store %arg11[%c0_27, %c0_28], %35 {strides = array<i32>} : memref<8x32xf32, #tpu.memory_space<vmem>>, vector<8x32xf32>,
      %c0_29 = arith.constant 0 : index
      %c0_30 = arith.constant 0 : index
      %37 = vector.load %arg8[%c0_29, %c0_30] : memref<16x32xf32, #tpu.memory_space<vmem>>, vector<16x32xf32>
      %cst_31 = arith.constant dense<0.000000e+00> : vector<8x32xf32>
      %38 = tpu.matmul %30, %37, %cst_31 {dimension_numbers = #tpu.dot_dimension_numbers<[1], [0], [0], [1], [0, 0, 1, 1], [], []>} : vector<8x16xf32>, vector<16x32xf32>, vector<8x32xf32> -> vector<8x32xf32>
      %c0_32 = arith.constant 0 : index
      %c0_33 = arith.constant 0 : index
      %39 = vector.load %arg9[%c0_32, %c0_33] : memref<1x32xf32, #tpu.memory_space<vmem>>, vector<1x32xf32>
      %40 = vector.broadcast %39 : vector<1x32xf32> to vector<8x32xf32>
      %41 = arith.addf %38, %40 : vector<8x32xf32>
      %c0_34 = arith.constant 0 : index
      %c0_35 = arith.constant 0 : index
      %42 = vector.load %arg12[%c0_34, %c0_35] : memref<8x32xf32, #tpu.memory_space<vmem>>, vector<8x32xf32>
      tpu.vector_store %arg12[%c0_34, %c0_35], %41 {strides = array<i32>} : memref<8x32xf32, #tpu.memory_space<vmem>>, vector<8x32xf32>,
    } else {
    }
    %c0 = arith.constant 0 : index
    %c0_1 = arith.constant 0 : index
    %c0_2 = arith.constant 0 : index
    %3 = vector.load %arg2[%c0, %c0_1, %c0_2] : memref<1x8x32xf32, #tpu.memory_space<vmem>>, vector<1x8x32xf32>
    %4 = vector.shape_cast %3 : vector<1x8x32xf32> to vector<8x32xf32>
    %c0_3 = arith.constant 0 : index
    %c0_4 = arith.constant 0 : index
    %5 = vector.load %arg4[%c0_3, %c0_4] : memref<32x32xf32, #tpu.memory_space<vmem>>, vector<32x32xf32>
    %cst = arith.constant dense<0.000000e+00> : vector<8x32xf32>
    %6 = tpu.matmul %4, %5, %cst {dimension_numbers = #tpu.dot_dimension_numbers<[1], [0], [0], [1], [0, 0, 1, 1], [], []>} : vector<8x32xf32>, vector<32x32xf32>, vector<8x32xf32> -> vector<8x32xf32>
    %c0_5 = arith.constant 0 : index
    %c0_6 = arith.constant 0 : index
    %7 = vector.load %arg5[%c0_5, %c0_6] : memref<1x32xf32, #tpu.memory_space<vmem>>, vector<1x32xf32>
    %8 = vector.broadcast %7 : vector<1x32xf32> to vector<8x32xf32>
    %9 = arith.addf %6, %8 : vector<8x32xf32>
    %c0_7 = arith.constant 0 : index
    %c0_8 = arith.constant 0 : index
    %10 = vector.load %arg11[%c0_7, %c0_8] : memref<8x32xf32, #tpu.memory_space<vmem>>, vector<8x32xf32>
    %c0_9 = arith.constant 0 : index
    %c0_10 = arith.constant 0 : index
    %11 = vector.load %arg12[%c0_9, %c0_10] : memref<8x32xf32, #tpu.memory_space<vmem>>, vector<8x32xf32>
    %cst_11 = arith.constant dense<0.000000e+00> : vector<8x8xf32>
    %12 = tpu.matmul %9, %10, %cst_11 {dimension_numbers = #tpu.dot_dimension_numbers<[1], [1], [0], [0], [0, 0, 1, 0], [], []>} : vector<8x32xf32>, vector<8x32xf32>, vector<8x8xf32> -> vector<8x8xf32>
    %cst_12 = arith.constant 0.353553385 : f32
    %13 = vector.broadcast %cst_12 : f32 to vector<8x8xf32>
    %14 = arith.mulf %12, %13 : vector<8x8xf32>
    %cst_13 = arith.constant dense<0xFF800000> : vector<8xf32>
    %15 = vector.multi_reduction <maximumf>, %14, %cst_13 [1] : vector<8x8xf32> to vector<8xf32>
    %16 = vector.shape_cast %15 : vector<8xf32> to vector<8x1xf32>
    %17 = vector.broadcast %16 : vector<8x1xf32> to vector<8x8xf32>
    %18 = arith.subf %14, %17 : vector<8x8xf32>
    %19 = math.exp %18 : vector<8x8xf32>
    %cst_14 = arith.constant dense<0.000000e+00> : vector<8xf32>
    %20 = vector.multi_reduction <add>, %19, %cst_14 [1] : vector<8x8xf32> to vector<8xf32>
    %21 = vector.shape_cast %20 : vector<8xf32> to vector<8x1xf32>
    %22 = tpu.reciprocal %21 : vector<8x1xf32> -> vector<8x1xf32>
    %23 = vector.broadcast %22 : vector<8x1xf32> to vector<8x8xf32>
    %24 = arith.mulf %19, %23 : vector<8x8xf32>
    %cst_15 = arith.constant dense<0.000000e+00> : vector<32x8xf32>
    %25 = tpu.matmul %11, %24, %cst_15 {dimension_numbers = #tpu.dot_dimension_numbers<[0], [1], [1], [0], [0, 1, 1, 0], [], []>} : vector<8x32xf32>, vector<8x8xf32>, vector<32x8xf32> -> vector<32x8xf32>
    %c0_16 = arith.constant 0 : index
    %c0_17 = arith.constant 0 : index
    %c0_18 = arith.constant 0 : index
    %26 = vector.load %arg10[%c0_16, %c0_17, %c0_18] : memref<1x32x8xf32, #tpu.memory_space<vmem>>, vector<1x32x8xf32>
    %27 = vector.shape_cast %26 : vector<1x32x8xf32> to vector<32x8xf32>
    %28 = vector.shape_cast %25 : vector<32x8xf32> to vector<1x32x8xf32>
    tpu.vector_store %arg10[%c0_16, %c0_17, %c0_18], %28 {strides = array<i32>} : memref<1x32x8xf32, #tpu.memory_space<vmem>>, vector<1x32x8xf32>,
    return
  }
  func.func @transform_0(%arg0: i32, %arg1: i32) -> (i32, i32, i32) {
    %c0_i32 = arith.constant 0 : i32
    %c0_i32_0 = arith.constant 0 : i32
    return %arg0, %arg1, %c0_i32 : i32, i32, i32
  }
  func.func @transform_1(%arg0: i32, %arg1: i32) -> (i32, i32, i32) {
    %c0_i32 = arith.constant 0 : i32
    %c0_i32_0 = arith.constant 0 : i32
    %c0_i32_1 = arith.constant 0 : i32
    return %arg0, %c0_i32, %c0_i32_0 : i32, i32, i32
  }
  func.func @transform_2(%arg0: i32, %arg1: i32) -> (i32, i32) {
    %c0_i32 = arith.constant 0 : i32
    %c0_i32_0 = arith.constant 0 : i32
    %c0_i32_1 = arith.constant 0 : i32
    return %c0_i32, %c0_i32_0 : i32, i32
  }
  func.func @transform_3(%arg0: i32, %arg1: i32) -> (i32, i32) {
    %c0_i32 = arith.constant 0 : i32
    %c0_i32_0 = arith.constant 0 : i32
    %c0_i32_1 = arith.constant 0 : i32
    return %c0_i32, %c0_i32_0 : i32, i32
  }
  func.func @transform_4(%arg0: i32, %arg1: i32) -> (i32, i32) {
    %c0_i32 = arith.constant 0 : i32
    %c0_i32_0 = arith.constant 0 : i32
    %c0_i32_1 = arith.constant 0 : i32
    return %c0_i32, %c0_i32_0 : i32, i32
  }
  func.func @transform_5(%arg0: i32, %arg1: i32) -> (i32, i32) {
    %c0_i32 = arith.constant 0 : i32
    %c0_i32_0 = arith.constant 0 : i32
    %c0_i32_1 = arith.constant 0 : i32
    return %c0_i32, %c0_i32_0 : i32, i32
  }
  func.func @transform_6(%arg0: i32, %arg1: i32) -> (i32, i32) {
    %c0_i32 = arith.constant 0 : i32
    %c0_i32_0 = arith.constant 0 : i32
    %c0_i32_1 = arith.constant 0 : i32
    return %c0_i32, %c0_i32_0 : i32, i32
  }
  func.func @transform_7(%arg0: i32, %arg1: i32) -> (i32, i32) {
    %c0_i32 = arith.constant 0 : i32
    %c0_i32_0 = arith.constant 0 : i32
    %c0_i32_1 = arith.constant 0 : i32
    return %c0_i32, %c0_i32_0 : i32, i32
  }
  func.func @transform_8(%arg0: i32, %arg1: i32) -> (i32, i32, i32) {
    %c0_i32 = arith.constant 0 : i32
    %c0_i32_0 = arith.constant 0 : i32
    return %arg0, %c0_i32, %arg1 : i32, i32, i32
  }
}

</mosaic_0001>

<llo_original>
// kernel: cross_attention.3
$region0: #{cross_attention.3}
  #allocation0 [shape = 'u32[]', space=smem, size = 0x4, offset = 0x4, fixed_abs, tag = 'smem constant byte address 0x4 - core index']
  #allocation1 [shape = 'u32[144,128]{1,0:T(1,128)}', space=vmem, size = 0x12000, scoped, tag = 'internal scratch']
  %s0 = inlined_call_operand.vmem [shape: f32[16,32], index: 0, kind: input, shape index: {}]
  %s1 = inlined_call_operand.vmem [shape: f32[32,32], index: 1, kind: input, shape index: {}]
  %s2 = inlined_call_operand.vmem [shape: f32[1,32], index: 2, kind: input, shape index: {}]
  %s3 = inlined_call_operand.hbm [shape: f32[16,32], index: 3, kind: output, shape index: {}]
  %s4 = sld [smem:[#allocation0]]
  $region22: #{cross_attention.3} parent=0
    _
  %s6 = ssub.s32 1, %s4
  %s7 = scalar_select 0, %s6, %s4
  $region1: #{cross_attention.3} parent=0
    #allocation2 [shape = 'u8[8192]{0}', space=vmem, size = 0x2000, scoped, tag = 'output window, operand 0, single buffered']
    #allocation3 [shape = 's32[1]{0}', space=sflag, size = 0x4, scoped, tag = 'scoped memory for cross_attention.3']
    %8 = vsyncpa [#allocation3], 0
    // Predicated region
    $region2: #{cross_attention.3} parent=1 // pred_check
      _
    $region3: #{cross_attention.3} parent=1 // pred_check_branch
      %10 = sbr.rel (0) target = $region5
    $region4: #{cross_attention.3} parent=1 // pred_region
      _
    $region5: #{cross_attention.3} parent=1 // pred_fallthru
      _
    // Predicated region
    $region6: #{cross_attention.3} parent=1 // pred_check
      _
    $region7: #{cross_attention.3} parent=1 // pred_check_branch
      %12 = sbr.rel (0) target = $region9
    $region8: #{cross_attention.3} parent=1 // pred_region
      _
    $region9: #{cross_attention.3} parent=1 // pred_fallthru
      _
    // Predicated region
    $region10: #{cross_attention.3} parent=1 // pred_check
      _
    $region11: #{cross_attention.3} parent=1 // pred_check_branch
      %14 = sbr.rel (0) target = $region13
    $region12: #{cross_attention.3} parent=1 // pred_region
      _
    $region13: #{cross_attention.3} parent=1 // pred_fallthru
      _
    %v15 = vld [vmem:[%s0] sm:$0xff]
    %v16 = vld [vmem:[%s0 + $0x8] sm:$0xff]
    %v17 = vld [vmem:[%s1] sm:$0xff]
    %v18 = vld [vmem:[%s1 + $0x8] sm:$0xff]
    %v19 = vld [vmem:[%s1 + $0x10] sm:$0xff]
    %v20 = vld [vmem:[%s1 + $0x18] sm:$0xff]
    %v21 = vld [vmem:[%s2] sm:$0x1]
    %v23 = vlaneseq
    %v24 = vshrl.u32 %v23, 7
    %v25 = vsub.s32 0, %v24
    %v26 = vrot.slane %v21, %v25
    %vm28 = vcmask 261120
    %v30 = vsel %vm28, %v15, 0
    %v33 = vsel %vm28, %v16, 0
    %35 = vmatprep.subr.mxu0 0.0
    %36 = vmatpush1.msra.mxu0 %v17
    %37 = vmatprep.subr.mxu0 0.0
    %38 = vmatpush1.msra.mxu0 %v18
    %39 = vmatprep.subr.mxu0 0.0
    %40 = vmatpush1.msra.mxu0 %v19
    %41 = vmatprep.subr.mxu0 0.0
    %42 = vmatpush1.msra.mxu0 %v20
    %43 = vmatprep.subr.mxu0 0.0
    %44 = vmatpush1.msra.mxu0 0.0
    %45 = vmatprep.subr.mxu0 0.0
    %46 = vmatpush1.msra.mxu0 0.0
    %47 = vmatprep.subr.mxu0 0.0
    %48 = vmatpush1.msra.mxu0 0.0
    %49 = vmatprep.subr.mxu0 0.0
    %50 = vmatpush1.msra.mxu0 0.0
    %51 = vmatprep.subr.mxu0 0.0
    %52 = vmatpush1.msra.mxu0 0.0
    %53 = vmatprep.subr.mxu0 0.0
    %54 = vmatpush1.msra.mxu0 0.0
    %55 = vmatprep.subr.mxu0 0.0
    %56 = vmatpush1.msra.mxu0 0.0
    %57 = vmatprep.subr.mxu0 0.0
    %58 = vmatpush1.msra.mxu0 0.0
    %59 = vmatprep.subr.mxu0 0.0
    %60 = vmatpush1.msra.mxu0 0.0
    %61 = vmatprep.subr.mxu0 0.0
    %62 = vmatpush1.msra.mxu0 0.0
    %63 = vmatprep.subr.mxu0 0.0
    %64 = vmatpush1.msra.mxu0 0.0
    %65 = vmatprep.subr.mxu0 0.0
    %66 = vmatpush1.msra.mxu0 0.0
    %67 = vmatprep.subr.mxu0 0.0
    %68 = vmatpush1.msra.mxu0 0.0
    %69 = vmatprep.subr.mxu0 0.0
    %70 = vmatpush1.msra.mxu0 0.0
    %71 = vmatprep.subr.mxu0 0.0
    %72 = vmatpush1.msra.mxu0 0.0
    %73 = vmatprep.subr.mxu0 0.0
    %74 = vmatpush1.msra.mxu0 0.0
    %75 = vmatprep.subr.mxu0 0.0
    %76 = vmatpush1.msra.mxu0 0.0
    %77 = vmatprep.subr.mxu0 0.0
    %78 = vmatpush1.msra.mxu0 0.0
    %79 = vmatprep.subr.mxu0 0.0
    %80 = vmatpush1.msra.mxu0 0.0
    %81 = vmatprep.subr.mxu0 0.0
    %82 = vmatpush1.msra.mxu0 0.0
    %83 = vmatprep.subr.mxu0 0.0
    %84 = vmatpush1.msra.mxu0 0.0
    %85 = vmatprep.subr.mxu0 0.0
    %86 = vmatpush1.msra.mxu0 0.0
    %87 = vmatprep.subr.mxu0 0.0
    %88 = vmatpush1.msra.mxu0 0.0
    %89 = vmatprep.subr.mxu0 0.0
    %90 = vmatpush1.msra.mxu0 0.0
    %91 = vmatprep.subr.mxu0 0.0
    %92 = vmatpush1.msra.mxu0 0.0
    %93 = vmatprep.subr.mxu0 0.0
    %94 = vmatpush1.msra.mxu0 0.0
    %95 = vmatprep.subr.mxu0 0.0
    %96 = vmatpush1.msra.mxu0 0.0
    %97 = vmatprep.subr.mxu0 0.0
    %98 = vmatpush1.msra.mxu0 0.0
    %99 = vmatprep.mubr.f32.mxu0 0.0
    %100 = vmatmul.mubr.f32.gmra.mrb[0].mxu0 %v30
    %v101 = vpop.f32.mrb[0].mxu0
    %v102 = vadd.f32 %v26, %v101
    %v103 = vpop.f32.mrb[0].mxu0
    %104 = vmatprep.mubr.f32.mxu0 0.0
    %105 = vmatmul.mubr.f32.gmra.mrb[0].mxu0 %v33
    %v106 = vpop.f32.mrb[0].mxu0
    %v107 = vadd.f32 %v26, %v106
    %v108 = vpop.f32.mrb[0].mxu0
    %109 = vdwg.mxu0
    %110 = vst.msk [vmem:[#allocation2] sm:$0xff] %vm28, %v102
    %111 = vst.msk [vmem:[#allocation2 + $0x8] sm:$0xff] %vm28, %v107
    // Predicated region
    $region14: #{cross_attention.3} parent=1 // pred_check
      _
    $region15: #{cross_attention.3} parent=1 // pred_check_branch
      %113 = sbr.rel (0) target = $region17
    $region16: #{cross_attention.3} parent=1 // pred_region
      %s115 = ssub.s32 256, 256
      %116 = vsyncadd [#allocation3], %s115
      %s117 = sshll.u32 [#allocation2], 4
      %s118 = int_to_ptr.vmem [resolvable:$true] %s117
      %123 = dma.vmem_to_hbm [thread:$0]  %s118, 256, %s3, [#allocation3], 128, 128, 8
    $region17: #{cross_attention.3} parent=1 // pred_fallthru
      _
    // Predicated region
    $region18: #{cross_attention.3} parent=1 // pred_check
      _
    $region19: #{cross_attention.3} parent=1 // pred_check_branch
      %125 = sbr.rel (0) target = $region21
    $region20: #{cross_attention.3} parent=1 // pred_region
      %126 = dma.done [#allocation3], 256
    $region21: #{cross_attention.3} parent=1 // pred_fallthru
      _
    %127 = vsyncpa [#allocation3], 1

// kernel: cross_attention.2
$region0: #{cross_attention.2}
  #allocation0 [shape = 'u32[]', space=smem, size = 0x4, offset = 0x4, fixed_abs, tag = 'smem constant byte address 0x4 - core index']
  #allocation1 [shape = 'u32[144,128]{1,0:T(1,128)}', space=vmem, size = 0x12000, scoped, tag = 'internal scratch']
  #allocation2 [shape = 'f32[8,32]{1,0:T(8,128)}', space=vmem, size = 0x1000, scoped, tag = 'scratch operand']
  #allocation3 [shape = 'f32[8,32]{1,0:T(8,128)}', space=vmem, size = 0x1000, scoped, tag = 'scratch operand']
  %s0 = inlined_call_operand.vmem [shape: f32[2,8,32], index: 0, kind: input, shape index: {}]
  %s1 = inlined_call_operand.vmem [shape: f32[2,8,16], index: 1, kind: input, shape index: {}]
  %s2 = inlined_call_operand.vmem [shape: f32[32,32], index: 2, kind: input, shape index: {}]
  %s3 = inlined_call_operand.vmem [shape: f32[1,32], index: 3, kind: input, shape index: {}]
  %s4 = inlined_call_operand.vmem [shape: f32[16,32], index: 4, kind: input, shape index: {}]
  %s5 = inlined_call_operand.vmem [shape: f32[1,32], index: 5, kind: input, shape index: {}]
  %s6 = inlined_call_operand.vmem [shape: f32[16,32], index: 6, kind: input, shape index: {}]
  %s7 = inlined_call_operand.vmem [shape: f32[1,32], index: 7, kind: input, shape index: {}]
  %s8 = inlined_call_operand.vmem [shape: f32[2,32,8], index: 8, kind: output, shape index: {}]
  %s9 = sld [smem:[#allocation0]]
  $region69: #{cross_attention.2} parent=0
    _
  %s11 = ssub.s32 1, %s9
  %s12 = scalar_select 0, %s11, %s9
  loop: start=0, step=1, limit=4
  $region2: #{cross_attention.2} parent=0 // loop_pre_header
    _
  $region3: #{cross_attention.2} parent=0 // loop_header
    %s14 = sphi 0, %s18
    %p15 = scmp.ge.s32.totalorder %s14, 4
    %s21 = sphi 0, %s33
    %s22 = sphi 0, %s29
    %s23 = sphi 0, %s21
    %s24 = sphi 0, %s22
    %s25 = sphi 0, %s23
    %s26 = sphi 0, %s24
    %s38 = sphi 0, %s40
    %s41 = sphi 0, %s38
    %s42 = sphi 0, %s41
    %s58 = sphi 0, %s42
    %s64 = sphi 0, %s66
    %s67 = sphi 0, %s64
    %s68 = sphi 0, %s67
    %s84 = sphi 0, %s68
    %s88 = sphi 0, %s88
    %s90 = sphi 0, %s88
    %s91 = sphi 0, %s90
    %s105 = sphi 0, %s91
    %s109 = sphi 0, %s109
    %s111 = sphi 0, %s109
    %s112 = sphi 0, %s111
    %s126 = sphi 0, %s112
    %s130 = sphi 0, %s130
    %s132 = sphi 0, %s130
    %s133 = sphi 0, %s132
    %s147 = sphi 0, %s133
    %s151 = sphi 0, %s151
    %s153 = sphi 0, %s151
    %s154 = sphi 0, %s153
    %s168 = sphi 0, %s154
    %s172 = sphi 0, %s172
    %s174 = sphi 0, %s172
    %s175 = sphi 0, %s174
    %s189 = sphi 0, %s175
    %s193 = sphi 0, %s193
    %s195 = sphi 0, %s193
    %s196 = sphi 0, %s195
    %s210 = sphi 0, %s196
    %s218 = sphi 0, %s220
    %s221 = sphi 0, %s218
    %s222 = sphi 0, %s221
    %s238 = sphi 0, %s222
  $region4: #{cross_attention.2} parent=0 // loop_header_branch
    %17 = sbr.rel (%p15) target = $region8
  $region5: #{cross_attention.2} parent=0 // loop_body
    %s19 = ssub.s32 %s14, 1
    %s20 = ssub.s32 %s14, 2
    %s27 = sadd.s32 1, %s22
    %p28 = scmp.ge.s32.totalorder %s27, 1
    %s29 = scalar_select %p28, 0, %s27
    %s30 = sadd.s32 1, %s21
    %s31 = scalar_select %p28, %s30, %s21
    %p32 = scmp.ge.s32.totalorder %s31, 2
    %s33 = scalar_select %p32, 0, %s31
    %s34 = ssub.s32 %s21, %s33
    %s35 = ssub.s32 %s22, %s29
    %s36 = sor.u32 %s34, %s35
    %p37 = scmp.eq.s32.totalorder %s36, 0
    %s39 = sadd.s32 %s38, 1
    %s40 = scalar_select %p37, %s38, %s39
    %p43 = pneg %p37
    %p44 = scmp.eq.s32.totalorder %s14, 1
    %p45 = por %p43, %p44
    %p46 = scmp.ne.s32.totalorder %s38, %s41
    %p47 = scmp.eq.s32.totalorder %s14, 0
    %p48 = por %p46, %p47
    %p49 = scmp.ne.s32.totalorder %s38, %s41
    %p50 = scmp.eq.s32.totalorder %s19, 1
    %p51 = por %p49, %p50
    %p52 = scmp.ne.s32.totalorder %s41, %s42
    %p53 = scmp.eq.s32.totalorder %s19, 0
    %p54 = por %p52, %p53
    %p55 = scmp.ne.s32.totalorder %s41, %s42
    %p56 = scmp.eq.s32.totalorder %s20, 1
    %p57 = por %p55, %p56
    %p59 = scmp.ne.s32.totalorder %s42, %s58
    %p60 = scmp.eq.s32.totalorder %s20, 0
    %p61 = por %p59, %p60
    %s62 = ssub.s32 %s21, %s33
    %p63 = scmp.eq.s32.totalorder %s62, 0
    %s65 = sadd.s32 %s64, 1
    %s66 = scalar_select %p63, %s64, %s65
    %p69 = pneg %p63
    %p70 = scmp.eq.s32.totalorder %s14, 1
    %p71 = por %p69, %p70
    %p72 = scmp.ne.s32.totalorder %s64, %s67
    %p73 = scmp.eq.s32.totalorder %s14, 0
    %p74 = por %p72, %p73
    %p75 = scmp.ne.s32.totalorder %s64, %s67
    %p76 = scmp.eq.s32.totalorder %s19, 1
    %p77 = por %p75, %p76
    %p78 = scmp.ne.s32.totalorder %s67, %s68
    %p79 = scmp.eq.s32.totalorder %s19, 0
    %p80 = por %p78, %p79
    %p81 = scmp.ne.s32.totalorder %s67, %s68
    %p82 = scmp.eq.s32.totalorder %s20, 1
    %p83 = por %p81, %p82
    %p85 = scmp.ne.s32.totalorder %s68, %s84
    %p86 = scmp.eq.s32.totalorder %s20, 0
    %p87 = por %p85, %p86
    %s89 = sadd.s32 %s88, 1
    %p92 = scmp.eq.s32.totalorder %s14, 1
    %p93 = scmp.ne.s32.totalorder %s88, %s90
    %p94 = scmp.eq.s32.totalorder %s14, 0
    %p95 = por %p93, %p94
    %p96 = scmp.ne.s32.totalorder %s88, %s90
    %p97 = scmp.eq.s32.totalorder %s19, 1
    %p98 = por %p96, %p97
    %p99 = scmp.ne.s32.totalorder %s90, %s91
    %p100 = scmp.eq.s32.totalorder %s19, 0
    %p101 = por %p99, %p100
    %p102 = scmp.ne.s32.totalorder %s90, %s91
    %p103 = scmp.eq.s32.totalorder %s20, 1
    %p104 = por %p102, %p103
    %p106 = scmp.ne.s32.totalorder %s91, %s105
    %p107 = scmp.eq.s32.totalorder %s20, 0
    %p108 = por %p106, %p107
    %s110 = sadd.s32 %s109, 1
    %p113 = scmp.eq.s32.totalorder %s14, 1
    %p114 = scmp.ne.s32.totalorder %s109, %s111
    %p115 = scmp.eq.s32.totalorder %s14, 0
    %p116 = por %p114, %p115
    %p117 = scmp.ne.s32.totalorder %s109, %s111
    %p118 = scmp.eq.s32.totalorder %s19, 1
    %p119 = por %p117, %p118
    %p120 = scmp.ne.s32.totalorder %s111, %s112
    %p121 = scmp.eq.s32.totalorder %s19, 0
    %p122 = por %p120, %p121
    %p123 = scmp.ne.s32.totalorder %s111, %s112
    %p124 = scmp.eq.s32.totalorder %s20, 1
    %p125 = por %p123, %p124
    %p127 = scmp.ne.s32.totalorder %s112, %s126
    %p128 = scmp.eq.s32.totalorder %s20, 0
    %p129 = por %p127, %p128
    %s131 = sadd.s32 %s130, 1
    %p134 = scmp.eq.s32.totalorder %s14, 1
    %p135 = scmp.ne.s32.totalorder %s130, %s132
    %p136 = scmp.eq.s32.totalorder %s14, 0
    %p137 = por %p135, %p136
    %p138 = scmp.ne.s32.totalorder %s130, %s132
    %p139 = scmp.eq.s32.totalorder %s19, 1
    %p140 = por %p138, %p139
    %p141 = scmp.ne.s32.totalorder %s132, %s133
    %p142 = scmp.eq.s32.totalorder %s19, 0
    %p143 = por %p141, %p142
    %p144 = scmp.ne.s32.totalorder %s132, %s133
    %p145 = scmp.eq.s32.totalorder %s20, 1
    %p146 = por %p144, %p145
    %p148 = scmp.ne.s32.totalorder %s133, %s147
    %p149 = scmp.eq.s32.totalorder %s20, 0
    %p150 = por %p148, %p149
    %s152 = sadd.s32 %s151, 1
    %p155 = scmp.eq.s32.totalorder %s14, 1
    %p156 = scmp.ne.s32.totalorder %s151, %s153
    %p157 = scmp.eq.s32.totalorder %s14, 0
    %p158 = por %p156, %p157
    %p159 = scmp.ne.s32.totalorder %s151, %s153
    %p160 = scmp.eq.s32.totalorder %s19, 1
    %p161 = por %p159, %p160
    %p162 = scmp.ne.s32.totalorder %s153, %s154
    %p163 = scmp.eq.s32.totalorder %s19, 0
    %p164 = por %p162, %p163
    %p165 = scmp.ne.s32.totalorder %s153, %s154
    %p166 = scmp.eq.s32.totalorder %s20, 1
    %p167 = por %p165, %p166
    %p169 = scmp.ne.s32.totalorder %s154, %s168
    %p170 = scmp.eq.s32.totalorder %s20, 0
    %p171 = por %p169, %p170
    %s173 = sadd.s32 %s172, 1
    %p176 = scmp.eq.s32.totalorder %s14, 1
    %p177 = scmp.ne.s32.totalorder %s172, %s174
    %p178 = scmp.eq.s32.totalorder %s14, 0
    %p179 = por %p177, %p178
    %p180 = scmp.ne.s32.totalorder %s172, %s174
    %p181 = scmp.eq.s32.totalorder %s19, 1
    %p182 = por %p180, %p181
    %p183 = scmp.ne.s32.totalorder %s174, %s175
    %p184 = scmp.eq.s32.totalorder %s19, 0
    %p185 = por %p183, %p184
    %p186 = scmp.ne.s32.totalorder %s174, %s175
    %p187 = scmp.eq.s32.totalorder %s20, 1
    %p188 = por %p186, %p187
    %p190 = scmp.ne.s32.totalorder %s175, %s189
    %p191 = scmp.eq.s32.totalorder %s20, 0
    %p192 = por %p190, %p191
    %s194 = sadd.s32 %s193, 1
    %p197 = scmp.eq.s32.totalorder %s14, 1
    %p198 = scmp.ne.s32.totalorder %s193, %s195
    %p199 = scmp.eq.s32.totalorder %s14, 0
    %p200 = por %p198, %p199
    %p201 = scmp.ne.s32.totalorder %s193, %s195
    %p202 = scmp.eq.s32.totalorder %s19, 1
    %p203 = por %p201, %p202
    %p204 = scmp.ne.s32.totalorder %s195, %s196
    %p205 = scmp.eq.s32.totalorder %s19, 0
    %p206 = por %p204, %p205
    %p207 = scmp.ne.s32.totalorder %s195, %s196
    %p208 = scmp.eq.s32.totalorder %s20, 1
    %p209 = por %p207, %p208
    %p211 = scmp.ne.s32.totalorder %s196, %s210
    %p212 = scmp.eq.s32.totalorder %s20, 0
    %p213 = por %p211, %p212
    %s214 = ssub.s32 %s21, %s33
    %s215 = ssub.s32 %s22, %s29
    %s216 = sor.u32 %s214, %s215
    %p217 = scmp.eq.s32.totalorder %s216, 0
    %s219 = sadd.s32 %s218, 1
    %s220 = scalar_select %p217, %s218, %s219
    %p223 = pneg %p217
    %p224 = scmp.eq.s32.totalorder %s14, 1
    %p225 = por %p223, %p224
    %p226 = scmp.ne.s32.totalorder %s218, %s221
    %p227 = scmp.eq.s32.totalorder %s14, 0
    %p228 = por %p226, %p227
    %p229 = scmp.ne.s32.totalorder %s218, %s221
    %p230 = scmp.eq.s32.totalorder %s19, 1
    %p231 = por %p229, %p230
    %p232 = scmp.ne.s32.totalorder %s221, %s222
    %p233 = scmp.eq.s32.totalorder %s19, 0
    %p234 = por %p232, %p233
    %p235 = scmp.ne.s32.totalorder %s221, %s222
    %p236 = scmp.eq.s32.totalorder %s20, 1
    %p237 = por %p235, %p236
    %p239 = scmp.ne.s32.totalorder %s222, %s238
    %p240 = scmp.eq.s32.totalorder %s20, 0
    %p241 = por %p239, %p240
    %p242 = scmp.le.s32.totalorder 1, %s14
    %p243 = scmp.lt.s32.totalorder %s14, 3
    %p244 = pnand %p242, %p243
    %p245 = pneg %p244
    // Predicated region
    $region9: #{cross_attention.2} parent=5 // pred_check
      _
    $region10: #{cross_attention.2} parent=5 // pred_check_branch
      %247 = sbr.rel (%p244) target = $region12
    $region11: #{cross_attention.2} parent=5 // pred_region
      %s248 = ssub.s32 %s14, 1
      // Predicated region
      $region13: #{cross_attention.2} parent=11 // pred_check
        %p249 = pneg %p101
      $region14: #{cross_attention.2} parent=11 // pred_check_branch
        %251 = sbr.rel (%p249) target = $region16
      $region15: #{cross_attention.2} parent=11 // pred_region
        _
      $region16: #{cross_attention.2} parent=11 // pred_fallthru
        _
      // Predicated region
      $region17: #{cross_attention.2} parent=11 // pred_check
        %p252 = pneg %p122
      $region18: #{cross_attention.2} parent=11 // pred_check_branch
        %254 = sbr.rel (%p252) target = $region20
      $region19: #{cross_attention.2} parent=11 // pred_region
        _
      $region20: #{cross_attention.2} parent=11 // pred_fallthru
        _
      // Predicated region
      $region21: #{cross_attention.2} parent=11 // pred_check
        %p255 = pneg %p143
      $region22: #{cross_attention.2} parent=11 // pred_check_branch
        %257 = sbr.rel (%p255) target = $region24
      $region23: #{cross_attention.2} parent=11 // pred_region
        _
      $region24: #{cross_attention.2} parent=11 // pred_fallthru
        _
      // Predicated region
      $region25: #{cross_attention.2} parent=11 // pred_check
        %p258 = pneg %p164
      $region26: #{cross_attention.2} parent=11 // pred_check_branch
        %260 = sbr.rel (%p258) target = $region28
      $region27: #{cross_attention.2} parent=11 // pred_region
        _
      $region28: #{cross_attention.2} parent=11 // pred_fallthru
        _
      // Predicated region
      $region29: #{cross_attention.2} parent=11 // pred_check
        %p261 = pneg %p185
      $region30: #{cross_attention.2} parent=11 // pred_check_branch
        %263 = sbr.rel (%p261) target = $region32
      $region31: #{cross_attention.2} parent=11 // pred_region
        _
      $region32: #{cross_attention.2} parent=11 // pred_fallthru
        _
      // Predicated region
      $region33: #{cross_attention.2} parent=11 // pred_check
        %p264 = pneg %p206
      $region34: #{cross_attention.2} parent=11 // pred_check_branch
        %266 = sbr.rel (%p264) target = $region36
      $region35: #{cross_attention.2} parent=11 // pred_region
        _
      $region36: #{cross_attention.2} parent=11 // pred_fallthru
        _
    $region12: #{cross_attention.2} parent=5 // pred_fallthru
      _
    %p267 = scmp.lt.s32.totalorder %s14, 2
    // Predicated region
    $region37: #{cross_attention.2} parent=5 // pred_check
      %p268 = pneg %p267
    $region38: #{cross_attention.2} parent=5 // pred_check_branch
      %270 = sbr.rel (%p268) target = $region40
    $region39: #{cross_attention.2} parent=5 // pred_region
      // Predicated region
      $region41: #{cross_attention.2} parent=39 // pred_check
        %p271 = pneg %p48
      $region42: #{cross_attention.2} parent=39 // pred_check_branch
        %273 = sbr.rel (%p271) target = $region44
      $region43: #{cross_attention.2} parent=39 // pred_region
        %p274 = scmp.lt.s32.totalorder %s21, 1
        %s275 = scalar_select %p274, %s21, 1
        %p276 = scmp.lt.s32.totalorder %s22, 0
        %s277 = scalar_select %p276, %s22, 0
        %s278 = sadd.s32 %s277, %s275
        %s279 = smul.addr %s278, 8
        %s280 = scalar_lea.vmem %s0, %s279
      $region44: #{cross_attention.2} parent=39 // pred_fallthru
        _
      // Predicated region
      $region45: #{cross_attention.2} parent=39 // pred_check
        %p281 = pneg %p74
      $region46: #{cross_attention.2} parent=39 // pred_check_branch
        %283 = sbr.rel (%p281) target = $region48
      $region47: #{cross_attention.2} parent=39 // pred_region
        %p284 = scmp.lt.s32.totalorder %s21, 1
        %s285 = scalar_select %p284, %s21, 1
        %s286 = smul.addr %s285, 8
        %s287 = scalar_lea.vmem %s1, %s286
      $region48: #{cross_attention.2} parent=39 // pred_fallthru
        _
    $region40: #{cross_attention.2} parent=5 // pred_fallthru
      _
    %p288 = scmp.le.s32.totalorder 1, %s14
    %p289 = scmp.lt.s32.totalorder %s14, 3
    %p290 = pnand %p288, %p289
    %p291 = pneg %p290
    // Predicated region
    $region49: #{cross_attention.2} parent=5 // pred_check
      _
    $region50: #{cross_attention.2} parent=5 // pred_check_branch
      %293 = sbr.rel (%p290) target = $region52
    $region51: #{cross_attention.2} parent=5 // pred_region
      %s294 = ssub.s32 %s14, 1
      %p295 = scmp.lt.s32.totalorder %s23, 1
      %s296 = scalar_select %p295, %s23, 1
      %p297 = scmp.lt.s32.totalorder %s24, 0
      %s298 = scalar_select %p297, %s24, 0
      %s299 = sadd.s32 %s298, %s296
      %s300 = smul.addr %s299, 8
      %s301 = scalar_lea.vmem %s0, %s300
      %p302 = pneg %p54
      %p303 = pneg %p51
      %p304 = scmp.lt.s32.totalorder %s23, 1
      %s305 = scalar_select %p304, %s23, 1
      %s306 = smul.addr %s305, 8
      %s307 = scalar_lea.vmem %s1, %s306
      %p308 = pneg %p80
      %p309 = pneg %p77
      %p310 = pneg %p101
      %p311 = pneg %p98
      %p312 = pneg %p122
      %p313 = pneg %p119
      %p314 = pneg %p143
      %p315 = pneg %p140
      %p316 = pneg %p164
      %p317 = pneg %p161
      %p318 = pneg %p185
      %p319 = pneg %p182
      %p320 = pneg %p206
      %p321 = pneg %p203
      %p322 = pneg %p234
      %p323 = pneg %p231
      %p324 = scmp.lt.s32.totalorder %s23, 1
      %s325 = scalar_select %p324, %s23, 1
      %p326 = scmp.lt.s32.totalorder %s24, 0
      %s327 = scalar_select %p326, %s24, 0
      %s328 = smul.addr %s325, 4
      %s329 = sadd.s32 %s327, %s328
      %s330 = smul.addr %s329, 8
      %s331 = scalar_lea.vmem %s8, %s330
      %p332 = scmp.lt.s32.totalorder %s23, 1
      %s333 = scalar_select %p332, %s23, 1
      %p334 = scmp.lt.s32.totalorder %s24, 0
      %s335 = scalar_select %p334, %s24, 0
      %s336 = sadd.s32 %s335, %s333
      %s337 = smul.addr %s336, 8
      %s338 = scalar_lea.vmem %s0, %s337
      %p339 = scmp.lt.s32.totalorder %s23, 1
      %s340 = scalar_select %p339, %s23, 1
      %s341 = smul.addr %s340, 8
      %s342 = scalar_lea.vmem %s1, %s341
      %p343 = scmp.lt.s32.totalorder %s23, 1
      %s344 = scalar_select %p343, %s23, 1
      %p345 = scmp.lt.s32.totalorder %s24, 0
      %s346 = scalar_select %p345, %s24, 0
      %s347 = smul.addr %s344, 4
      %s348 = sadd.s32 %s346, %s347
      %s349 = smul.addr %s348, 8
      %s350 = scalar_lea.vmem %s8, %s349
      %p351 = scmp.eq.s32.totalorder %s24, 0
      // Predicated region
      $region53: #{cross_attention.2} parent=51 // pred_check
        %p352 = pneg %p351
      $region54: #{cross_attention.2} parent=51 // pred_check_branch
        %354 = sbr.rel (%p352) target = $region56
      $region55: #{cross_attention.2} parent=51 // pred_region
        %v355 = vld [vmem:[%s342] sm:$0xff]
        %v356 = vld [vmem:[%s4] sm:$0xff]
        %v357 = vld [vmem:[%s4 + $0x8] sm:$0xff]
        %v358 = vld [vmem:[%s5] sm:$0x1]
        %v360 = vlaneseq
        %v361 = vshrl.u32 %v360, 7
        %v362 = vsub.s32 0, %v361
        %v363 = vrot.slane %v358, %v362
        %vm365 = vcmask 130048
        %v367 = vsel %vm365, %v355, 0
        %369 = vmatprep.subr.mxu0 0.0
        %370 = vmatpush1.msra.mxu0 %v356
        %371 = vmatprep.subr.mxu0 0.0
        %372 = vmatpush1.msra.mxu0 %v357
        %373 = vmatprep.subr.mxu0 0.0
        %374 = vmatpush1.msra.mxu0 0.0
        %375 = vmatprep.subr.mxu0 0.0
        %376 = vmatpush1.msra.mxu0 0.0
        %377 = vmatprep.subr.mxu0 0.0
        %378 = vmatpush1.msra.mxu0 0.0
        %379 = vmatprep.subr.mxu0 0.0
        %380 = vmatpush1.msra.mxu0 0.0
        %381 = vmatprep.subr.mxu0 0.0
        %382 = vmatpush1.msra.mxu0 0.0
        %383 = vmatprep.subr.mxu0 0.0
        %384 = vmatpush1.msra.mxu0 0.0
        %385 = vmatprep.subr.mxu0 0.0
        %386 = vmatpush1.msra.mxu0 0.0
        %387 = vmatprep.subr.mxu0 0.0
        %388 = vmatpush1.msra.mxu0 0.0
        %389 = vmatprep.subr.mxu0 0.0
        %390 = vmatpush1.msra.mxu0 0.0
        %391 = vmatprep.subr.mxu0 0.0
        %392 = vmatpush1.msra.mxu0 0.0
        %393 = vmatprep.subr.mxu0 0.0
        %394 = vmatpush1.msra.mxu0 0.0
        %395 = vmatprep.subr.mxu0 0.0
        %396 = vmatpush1.msra.mxu0 0.0
        %397 = vmatprep.subr.mxu0 0.0
        %398 = vmatpush1.msra.mxu0 0.0
        %399 = vmatprep.subr.mxu0 0.0
        %400 = vmatpush1.msra.mxu0 0.0
        %401 = vmatprep.subr.mxu0 0.0
        %402 = vmatpush1.msra.mxu0 0.0
        %403 = vmatprep.subr.mxu0 0.0
        %404 = vmatpush1.msra.mxu0 0.0
        %405 = vmatprep.subr.mxu0 0.0
        %406 = vmatpush1.msra.mxu0 0.0
        %407 = vmatprep.subr.mxu0 0.0
        %408 = vmatpush1.msra.mxu0 0.0
        %409 = vmatprep.subr.mxu0 0.0
        %410 = vmatpush1.msra.mxu0 0.0
        %411 = vmatprep.subr.mxu0 0.0
        %412 = vmatpush1.msra.mxu0 0.0
        %413 = vmatprep.subr.mxu0 0.0
        %414 = vmatpush1.msra.mxu0 0.0
        %415 = vmatprep.subr.mxu0 0.0
        %416 = vmatpush1.msra.mxu0 0.0
        %417 = vmatprep.subr.mxu0 0.0
        %418 = vmatpush1.msra.mxu0 0.0
        %419 = vmatprep.subr.mxu0 0.0
        %420 = vmatpush1.msra.mxu0 0.0
        %421 = vmatprep.subr.mxu0 0.0
        %422 = vmatpush1.msra.mxu0 0.0
        %423 = vmatprep.subr.mxu0 0.0
        %424 = vmatpush1.msra.mxu0 0.0
        %425 = vmatprep.subr.mxu0 0.0
        %426 = vmatpush1.msra.mxu0 0.0
        %427 = vmatprep.subr.mxu0 0.0
        %428 = vmatpush1.msra.mxu0 0.0
        %429 = vmatprep.subr.mxu0 0.0
        %430 = vmatpush1.msra.mxu0 0.0
        %431 = vmatprep.subr.mxu0 0.0
        %432 = vmatpush1.msra.mxu0 0.0
        %433 = vmatprep.mubr.f32.mxu0 0.0
        %434 = vmatmul.mubr.f32.gmra.mrb[0].mxu0 %v367
        %v435 = vpop.f32.mrb[0].mxu0
        %v436 = vadd.f32 %v363, %v435
        %v437 = vpop.f32.mrb[0].mxu0
        %438 = vdwg.mxu0
        %vm439 = vcmask 261120
        %440 = vst.msk [vmem:[#allocation2] sm:$0xff] %vm439, %v436
        %v441 = vld [vmem:[%s6] sm:$0xff]
        %v442 = vld [vmem:[%s6 + $0x8] sm:$0xff]
        %v443 = vld [vmem:[%s7] sm:$0x1]
        %v445 = vlaneseq
        %v446 = vshrl.u32 %v445, 7
        %v447 = vsub.s32 0, %v446
        %v448 = vrot.slane %v443, %v447
        %450 = vmatprep.subr.mxu0 0.0
        %451 = vmatpush1.msra.mxu0 %v441
        %452 = vmatprep.subr.mxu0 0.0
        %453 = vmatpush1.msra.mxu0 %v442
        %454 = vmatprep.subr.mxu0 0.0
        %455 = vmatpush1.msra.mxu0 0.0
        %456 = vmatprep.subr.mxu0 0.0
        %457 = vmatpush1.msra.mxu0 0.0
        %458 = vmatprep.subr.mxu0 0.0
        %459 = vmatpush1.msra.mxu0 0.0
        %460 = vmatprep.subr.mxu0 0.0
        %461 = vmatpush1.msra.mxu0 0.0
        %462 = vmatprep.subr.mxu0 0.0
        %463 = vmatpush1.msra.mxu0 0.0
        %464 = vmatprep.subr.mxu0 0.0
        %465 = vmatpush1.msra.mxu0 0.0
        %466 = vmatprep.subr.mxu0 0.0
        %467 = vmatpush1.msra.mxu0 0.0
        %468 = vmatprep.subr.mxu0 0.0
        %469 = vmatpush1.msra.mxu0 0.0
        %470 = vmatprep.subr.mxu0 0.0
        %471 = vmatpush1.msra.mxu0 0.0
        %472 = vmatprep.subr.mxu0 0.0
        %473 = vmatpush1.msra.mxu0 0.0
        %474 = vmatprep.subr.mxu0 0.0
        %475 = vmatpush1.msra.mxu0 0.0
        %476 = vmatprep.subr.mxu0 0.0
        %477 = vmatpush1.msra.mxu0 0.0
        %478 = vmatprep.subr.mxu0 0.0
        %479 = vmatpush1.msra.mxu0 0.0
        %480 = vmatprep.subr.mxu0 0.0
        %481 = vmatpush1.msra.mxu0 0.0
        %482 = vmatprep.subr.mxu0 0.0
        %483 = vmatpush1.msra.mxu0 0.0
        %484 = vmatprep.subr.mxu0 0.0
        %485 = vmatpush1.msra.mxu0 0.0
        %486 = vmatprep.subr.mxu0 0.0
        %487 = vmatpush1.msra.mxu0 0.0
        %488 = vmatprep.subr.mxu0 0.0
        %489 = vmatpush1.msra.mxu0 0.0
        %490 = vmatprep.subr.mxu0 0.0
        %491 = vmatpush1.msra.mxu0 0.0
        %492 = vmatprep.subr.mxu0 0.0
        %493 = vmatpush1.msra.mxu0 0.0
        %494 = vmatprep.subr.mxu0 0.0
        %495 = vmatpush1.msra.mxu0 0.0
        %496 = vmatprep.subr.mxu0 0.0
        %497 = vmatpush1.msra.mxu0 0.0
        %498 = vmatprep.subr.mxu0 0.0
        %499 = vmatpush1.msra.mxu0 0.0
        %500 = vmatprep.subr.mxu0 0.0
        %501 = vmatpush1.msra.mxu0 0.0
        %502 = vmatprep.subr.mxu0 0.0
        %503 = vmatpush1.msra.mxu0 0.0
        %504 = vmatprep.subr.mxu0 0.0
        %505 = vmatpush1.msra.mxu0 0.0
        %506 = vmatprep.subr.mxu0 0.0
        %507 = vmatpush1.msra.mxu0 0.0
        %508 = vmatprep.subr.mxu0 0.0
        %509 = vmatpush1.msra.mxu0 0.0
        %510 = vmatprep.subr.mxu0 0.0
        %511 = vmatpush1.msra.mxu0 0.0
        %512 = vmatprep.subr.mxu0 0.0
        %513 = vmatpush1.msra.mxu0 0.0
        %514 = vmatprep.mubr.f32.mxu0 0.0
        %515 = vmatmul.mubr.f32.gmra.mrb[0].mxu0 %v367
        %v516 = vpop.f32.mrb[0].mxu0
        %v517 = vadd.f32 %v448, %v516
        %v518 = vpop.f32.mrb[0].mxu0
        %519 = vdwg.mxu0
        %520 = vst.msk [vmem:[#allocation3] sm:$0xff] %vm439, %v517
      $region56: #{cross_attention.2} parent=51 // pred_fallthru
        _
      %v521 = vld [vmem:[%s338] sm:$0xff]
      %v522 = vld [vmem:[%s2] sm:$0xff]
      %v523 = vld [vmem:[%s2 + $0x8] sm:$0xff]
      %v524 = vld [vmem:[%s2 + $0x10] sm:$0xff]
      %v525 = vld [vmem:[%s2 + $0x18] sm:$0xff]
      %v526 = vld [vmem:[%s3] sm:$0x1]
      %v528 = vlaneseq
      %v529 = vshrl.u32 %v528, 7
      %v530 = vsub.s32 0, %v529
      %v531 = vrot.slane %v526, %v530
      %vm533 = vcmask 261120
      %v535 = vsel %vm533, %v521, 0
      %537 = vmatprep.subr.mxu0 0.0
      %538 = vmatpush1.msra.mxu0 %v522
      %539 = vmatprep.subr.mxu0 0.0
      %540 = vmatpush1.msra.mxu0 %v523
      %541 = vmatprep.subr.mxu0 0.0
      %542 = vmatpush1.msra.mxu0 %v524
      %543 = vmatprep.subr.mxu0 0.0
      %544 = vmatpush1.msra.mxu0 %v525
      %545 = vmatprep.subr.mxu0 0.0
      %546 = vmatpush1.msra.mxu0 0.0
      %547 = vmatprep.subr.mxu0 0.0
      %548 = vmatpush1.msra.mxu0 0.0
      %549 = vmatprep.subr.mxu0 0.0
      %550 = vmatpush1.msra.mxu0 0.0
      %551 = vmatprep.subr.mxu0 0.0
      %552 = vmatpush1.msra.mxu0 0.0
      %553 = vmatprep.subr.mxu0 0.0
      %554 = vmatpush1.msra.mxu0 0.0
      %555 = vmatprep.subr.mxu0 0.0
      %556 = vmatpush1.msra.mxu0 0.0
      %557 = vmatprep.subr.mxu0 0.0
      %558 = vmatpush1.msra.mxu0 0.0
      %559 = vmatprep.subr.mxu0 0.0
      %560 = vmatpush1.msra.mxu0 0.0
      %561 = vmatprep.subr.mxu0 0.0
      %562 = vmatpush1.msra.mxu0 0.0
      %563 = vmatprep.subr.mxu0 0.0
      %564 = vmatpush1.msra.mxu0 0.0
      %565 = vmatprep.subr.mxu0 0.0
      %566 = vmatpush1.msra.mxu0 0.0
      %567 = vmatprep.subr.mxu0 0.0
      %568 = vmatpush1.msra.mxu0 0.0
      %569 = vmatprep.subr.mxu0 0.0
      %570 = vmatpush1.msra.mxu0 0.0
      %571 = vmatprep.subr.mxu0 0.0
      %572 = vmatpush1.msra.mxu0 0.0
      %573 = vmatprep.subr.mxu0 0.0
      %574 = vmatpush1.msra.mxu0 0.0
      %575 = vmatprep.subr.mxu0 0.0
      %576 = vmatpush1.msra.mxu0 0.0
      %577 = vmatprep.subr.mxu0 0.0
      %578 = vmatpush1.msra.mxu0 0.0
      %579 = vmatprep.subr.mxu0 0.0
      %580 = vmatpush1.msra.mxu0 0.0
      %581 = vmatprep.subr.mxu0 0.0
      %582 = vmatpush1.msra.mxu0 0.0
      %583 = vmatprep.subr.mxu0 0.0
      %584 = vmatpush1.msra.mxu0 0.0
      %585 = vmatprep.subr.mxu0 0.0
      %586 = vmatpush1.msra.mxu0 0.0
      %587 = vmatprep.subr.mxu0 0.0
      %588 = vmatpush1.msra.mxu0 0.0
      %589 = vmatprep.subr.mxu0 0.0
      %590 = vmatpush1.msra.mxu0 0.0
      %591 = vmatprep.subr.mxu0 0.0
      %592 = vmatpush1.msra.mxu0 0.0
      %593 = vmatprep.subr.mxu0 0.0
      %594 = vmatpush1.msra.mxu0 0.0
      %595 = vmatprep.subr.mxu0 0.0
      %596 = vmatpush1.msra.mxu0 0.0
      %597 = vmatprep.subr.mxu0 0.0
      %598 = vmatpush1.msra.mxu0 0.0
      %599 = vmatprep.subr.mxu0 0.0
      %600 = vmatpush1.msra.mxu0 0.0
      %601 = vmatprep.mubr.f32.mxu0 0.0
      %602 = vmatmul.mubr.f32.gmra.mrb[0].mxu0 %v535
      %v603 = vpop.f32.mrb[0].mxu0
      %v604 = vadd.f32 %v531, %v603
      %v605 = vpop.f32.mrb[0].mxu0
      %606 = vdwg.mxu0
      %v607 = vld [vmem:[#allocation2] sm:$0xff]
      %v608 = vld [vmem:[#allocation3] sm:$0xff]
      %v610 = vsel %vm533, %v604, 0
      %v613 = vsel %vm533, %v607, 0
      %615 = vmatprep.subr.mxu0 0.0
      %616 = vmatpush1.xpose.msra.mxu0 %v613
      %617 = vmatprep.subr.mxu0 0.0
      %618 = vmatpush1.xpose.msra.mxu0 0.0
      %619 = vmatprep.subr.mxu0 0.0
      %620 = vmatpush1.xpose.msra.mxu0 0.0
      %621 = vmatprep.subr.mxu0 0.0
      %622 = vmatpush1.xpose.msra.mxu0 0.0
      %623 = vmatprep.subr.mxu0 0.0
      %624 = vmatpush1.xpose.msra.mxu0 0.0
      %625 = vmatprep.subr.mxu0 0.0
      %626 = vmatpush1.xpose.msra.mxu0 0.0
      %627 = vmatprep.subr.mxu0 0.0
      %628 = vmatpush1.xpose.msra.mxu0 0.0
      %629 = vmatprep.subr.mxu0 0.0
      %630 = vmatpush1.xpose.msra.mxu0 0.0
      %631 = vmatprep.subr.mxu0 0.0
      %632 = vmatpush1.xpose.msra.mxu0 0.0
      %633 = vmatprep.subr.mxu0 0.0
      %634 = vmatpush1.xpose.msra.mxu0 0.0
      %635 = vmatprep.subr.mxu0 0.0
      %636 = vmatpush1.xpose.msra.mxu0 0.0
      %637 = vmatprep.subr.mxu0 0.0
      %638 = vmatpush1.xpose.msra.mxu0 0.0
      %639 = vmatprep.subr.mxu0 0.0
      %640 = vmatpush1.xpose.msra.mxu0 0.0
      %641 = vmatprep.subr.mxu0 0.0
      %642 = vmatpush1.xpose.msra.mxu0 0.0
      %643 = vmatprep.subr.mxu0 0.0
      %644 = vmatpush1.xpose.msra.mxu0 0.0
      %645 = vmatprep.subr.mxu0 0.0
      %646 = vmatpush1.xpose.msra.mxu0 0.0
      %647 = vmatprep.subr.mxu0 0.0
      %648 = vmatpush1.xpose.msra.mxu0 0.0
      %649 = vmatprep.subr.mxu0 0.0
      %650 = vmatpush1.xpose.msra.mxu0 0.0
      %651 = vmatprep.subr.mxu0 0.0
      %652 = vmatpush1.xpose.msra.mxu0 0.0
      %653 = vmatprep.subr.mxu0 0.0
      %654 = vmatpush1.xpose.msra.mxu0 0.0
      %655 = vmatprep.subr.mxu0 0.0
      %656 = vmatpush1.xpose.msra.mxu0 0.0
      %657 = vmatprep.subr.mxu0 0.0
      %658 = vmatpush1.xpose.msra.mxu0 0.0
      %659 = vmatprep.subr.mxu0 0.0
      %660 = vmatpush1.xpose.msra.mxu0 0.0
      %661 = vmatprep.subr.mxu0 0.0
      %662 = vmatpush1.xpose.msra.mxu0 0.0
      %663 = vmatprep.subr.mxu0 0.0
      %664 = vmatpush1.xpose.msra.mxu0 0.0
      %665 = vmatprep.subr.mxu0 0.0
      %666 = vmatpush1.xpose.msra.mxu0 0.0
      %667 = vmatprep.subr.mxu0 0.0
      %668 = vmatpush1.xpose.msra.mxu0 0.0
      %669 = vmatprep.subr.mxu0 0.0
      %670 = vmatpush1.xpose.msra.mxu0 0.0
      %671 = vmatprep.subr.mxu0 0.0
      %672 = vmatpush1.xpose.msra.mxu0 0.0
      %673 = vmatprep.subr.mxu0 0.0
      %674 = vmatpush1.xpose.msra.mxu0 0.0
      %675 = vmatprep.subr.mxu0 0.0
      %676 = vmatpush1.xpose.msra.mxu0 0.0
      %677 = vmatprep.subr.mxu0 0.0
      %678 = vmatpush1.xpose.msra.mxu0 0.0
      %679 = vmatprep.mubr.f32.mxu0 0.0
      %680 = vmatmul.mubr.f32.gmra.mrb[0].mxu0 %v610
      %v681 = vpop.f32.mrb[0].mxu0
      %v682 = vadd.f32 0.0, %v681
      %v683 = vpop.f32.mrb[0].mxu0
      %684 = vdwg.mxu0
      %v685 = vmul.f32 %v682, 0.35355338
      %vm686 = vcmask 64512
      %v687 = vsel %vm686, %v685, -inf
      %688 = vmax.xlane.f32.xlu0 %v687
      %v689 = vpop.xlane.xlu0 %688
      %v690 = vsub.f32 %v685, %v689
      %v691 = vmul.f32 %v690, 1.442695
      %v692 = vpow.pop %v691
      %v693 = vsel %vm686, %v692, 0.0
      %694 = vadd.xlane.f32.xlu0 %v693
      %v695 = vpop.xlane.xlu0 %694
      %v696 = vrcp.pop %v695
      %v697 = vmul.f32 %v692, %v696
      %698 = vxpose.xlu0.b32.start [1/16] %v608, 128
      %699 = vxpose.xlu0.b32.cont [2/16] 0.0, 128
      %700 = vxpose.xlu0.b32.cont [3/16] 0.0, 128
      %701 = vxpose.xlu0.b32.cont [4/16] 0.0, 128
      %702 = vxpose.xlu0.b32.cont [5/16] 0.0, 128
      %703 = vxpose.xlu0.b32.cont [6/16] 0.0, 128
      %704 = vxpose.xlu0.b32.cont [7/16] 0.0, 128
      %705 = vxpose.xlu0.b32.cont [8/16] 0.0, 128
      %706 = vxpose.xlu0.b32.cont [9/16] 0.0, 128
      %707 = vxpose.xlu0.b32.cont [10/16] 0.0, 128
      %708 = vxpose.xlu0.b32.cont [11/16] 0.0, 128
      %709 = vxpose.xlu0.b32.cont [12/16] 0.0, 128
      %710 = vxpose.xlu0.b32.cont [13/16] 0.0, 128
      %711 = vxpose.xlu0.b32.cont [14/16] 0.0, 128
      %712 = vxpose.xlu0.b32.cont [15/16] 0.0, 128
      %713 = vxpose.xlu0.b32.end [16/16] 0.0, 128
      %v714 = vpop.trf.xlu0
      %v715 = vpop.trf.xlu0
      %v716 = vpop.trf.xlu0
      %v717 = vpop.trf.xlu0
      %v718 = vpop.trf.xlu0
      %v719 = vpop.trf.xlu0
      %v720 = vpop.trf.xlu0
      %v721 = vpop.trf.xlu0
      %v722 = vpop.trf.xlu0
      %v723 = vpop.trf.xlu0
      %v724 = vpop.trf.xlu0
      %v725 = vpop.trf.xlu0
      %v726 = vpop.trf.xlu0
      %v727 = vpop.trf.xlu0
      %v728 = vpop.trf.xlu0
      %v729 = vpop.trf.xlu0
      %v731 = vsel %vm686, %v714, 0
      %v734 = vsel %vm686, %v715, 0
      %v737 = vsel %vm686, %v716, 0
      %v740 = vsel %vm686, %v717, 0
      %v743 = vsel %vm686, %v697, 0
      %745 = vmatprep.subr.mxu0 0.0
      %746 = vmatpush1.xpose.msra.mxu0 %v743
      %747 = vmatprep.subr.mxu0 0.0
      %748 = vmatpush1.xpose.msra.mxu0 0.0
      %749 = vmatprep.subr.mxu0 0.0
      %750 = vmatpush1.xpose.msra.mxu0 0.0
      %751 = vmatprep.subr.mxu0 0.0
      %752 = vmatpush1.xpose.msra.mxu0 0.0
      %753 = vmatprep.subr.mxu0 0.0
      %754 = vmatpush1.xpose.msra.mxu0 0.0
      %755 = vmatprep.subr.mxu0 0.0
      %756 = vmatpush1.xpose.msra.mxu0 0.0
      %757 = vmatprep.subr.mxu0 0.0
      %758 = vmatpush1.xpose.msra.mxu0 0.0
      %759 = vmatprep.subr.mxu0 0.0
      %760 = vmatpush1.xpose.msra.mxu0 0.0
      %761 = vmatprep.subr.mxu0 0.0
      %762 = vmatpush1.xpose.msra.mxu0 0.0
      %763 = vmatprep.subr.mxu0 0.0
      %764 = vmatpush1.xpose.msra.mxu0 0.0
      %765 = vmatprep.subr.mxu0 0.0
      %766 = vmatpush1.xpose.msra.mxu0 0.0
      %767 = vmatprep.subr.mxu0 0.0
      %768 = vmatpush1.xpose.msra.mxu0 0.0
      %769 = vmatprep.subr.mxu0 0.0
      %770 = vmatpush1.xpose.msra.mxu0 0.0
      %771 = vmatprep.subr.mxu0 0.0
      %772 = vmatpush1.xpose.msra.mxu0 0.0
      %773 = vmatprep.subr.mxu0 0.0
      %774 = vmatpush1.xpose.msra.mxu0 0.0
      %775 = vmatprep.subr.mxu0 0.0
      %776 = vmatpush1.xpose.msra.mxu0 0.0
      %777 = vmatprep.subr.mxu0 0.0
      %778 = vmatpush1.xpose.msra.mxu0 0.0
      %779 = vmatprep.subr.mxu0 0.0
      %780 = vmatpush1.xpose.msra.mxu0 0.0
      %781 = vmatprep.subr.mxu0 0.0
      %782 = vmatpush1.xpose.msra.mxu0 0.0
      %783 = vmatprep.subr.mxu0 0.0
      %784 = vmatpush1.xpose.msra.mxu0 0.0
      %785 = vmatprep.subr.mxu0 0.0
      %786 = vmatpush1.xpose.msra.mxu0 0.0
      %787 = vmatprep.subr.mxu0 0.0
      %788 = vmatpush1.xpose.msra.mxu0 0.0
      %789 = vmatprep.subr.mxu0 0.0
      %790 = vmatpush1.xpose.msra.mxu0 0.0
      %791 = vmatprep.subr.mxu0 0.0
      %792 = vmatpush1.xpose.msra.mxu0 0.0
      %793 = vmatprep.subr.mxu0 0.0
      %794 = vmatpush1.xpose.msra.mxu0 0.0
      %795 = vmatprep.subr.mxu0 0.0
      %796 = vmatpush1.xpose.msra.mxu0 0.0
      %797 = vmatprep.subr.mxu0 0.0
      %798 = vmatpush1.xpose.msra.mxu0 0.0
      %799 = vmatprep.subr.mxu0 0.0
      %800 = vmatpush1.xpose.msra.mxu0 0.0
      %801 = vmatprep.subr.mxu0 0.0
      %802 = vmatpush1.xpose.msra.mxu0 0.0
      %803 = vmatprep.subr.mxu0 0.0
      %804 = vmatpush1.xpose.msra.mxu0 0.0
      %805 = vmatprep.subr.mxu0 0.0
      %806 = vmatpush1.xpose.msra.mxu0 0.0
      %807 = vmatprep.subr.mxu0 0.0
      %808 = vmatpush1.xpose.msra.mxu0 0.0
      %809 = vmatprep.mubr.f32.mxu0 0.0
      %810 = vmatmul.mubr.f32.gmra.mrb[0].mxu0 %v731
      %v811 = vpop.f32.mrb[0].mxu0
      %v812 = vadd.f32 0.0, %v811
      %v813 = vpop.f32.mrb[0].mxu0
      %814 = vmatprep.mubr.f32.mxu0 0.0
      %815 = vmatmul.mubr.f32.gmra.mrb[0].mxu0 %v734
      %v816 = vpop.f32.mrb[0].mxu0
      %v817 = vadd.f32 0.0, %v816
      %v818 = vpop.f32.mrb[0].mxu0
      %819 = vmatprep.mubr.f32.mxu0 0.0
      %820 = vmatmul.mubr.f32.gmra.mrb[0].mxu0 %v737
      %v821 = vpop.f32.mrb[0].mxu0
      %v822 = vadd.f32 0.0, %v821
      %v823 = vpop.f32.mrb[0].mxu0
      %824 = vmatprep.mubr.f32.mxu0 0.0
      %825 = vmatmul.mubr.f32.gmra.mrb[0].mxu0 %v740
      %v826 = vpop.f32.mrb[0].mxu0
      %v827 = vadd.f32 0.0, %v826
      %v828 = vpop.f32.mrb[0].mxu0
      %829 = vdwg.mxu0
      %830 = vst.msk [vmem:[%s350] sm:$0xff] %vm686, %v812
      %831 = vst.msk [vmem:[%s350 + $0x8] sm:$0xff] %vm686, %v817
      %832 = vst.msk [vmem:[%s350 + $0x10] sm:$0xff] %vm686, %v822
      %833 = vst.msk [vmem:[%s350 + $0x18] sm:$0xff] %vm686, %v827
      %p834 = scmp.lt.s32.totalorder %s23, 1
      %s835 = scalar_select %p834, %s23, 1
      %p836 = scmp.lt.s32.totalorder %s24, 0
      %s837 = scalar_select %p836, %s24, 0
      %s838 = smul.addr %s835, 4
      %s839 = sadd.s32 %s837, %s838
      %s840 = smul.addr %s839, 8
      %s841 = scalar_lea.vmem %s8, %s840
      // Predicated region
      $region57: #{cross_attention.2} parent=51 // pred_check
        %p842 = pneg %p231
      $region58: #{cross_attention.2} parent=51 // pred_check_branch
        %844 = sbr.rel (%p842) target = $region60
      $region59: #{cross_attention.2} parent=51 // pred_region
        _
      $region60: #{cross_attention.2} parent=51 // pred_fallthru
        _
    $region52: #{cross_attention.2} parent=5 // pred_fallthru
      _
    %p845 = scmp.le.s32.totalorder 2, %s14
    // Predicated region
    $region61: #{cross_attention.2} parent=5 // pred_check
      %p846 = pneg %p845
    $region62: #{cross_attention.2} parent=5 // pred_check_branch
      %848 = sbr.rel (%p846) target = $region64
    $region63: #{cross_attention.2} parent=5 // pred_region
      %s849 = ssub.s32 %s14, 2
      // Predicated region
      $region65: #{cross_attention.2} parent=63 // pred_check
        %p850 = pneg %p237
      $region66: #{cross_attention.2} parent=63 // pred_check_branch
        %852 = sbr.rel (%p850) target = $region68
      $region67: #{cross_attention.2} parent=63 // pred_region
        %p853 = scmp.lt.s32.totalorder %s25, 1
        %s854 = scalar_select %p853, %s25, 1
        %p855 = scmp.lt.s32.totalorder %s26, 0
        %s856 = scalar_select %p855, %s26, 0
        %s857 = smul.addr %s854, 4
        %s858 = sadd.s32 %s856, %s857
        %s859 = smul.addr %s858, 8
        %s860 = scalar_lea.vmem %s8, %s859
      $region68: #{cross_attention.2} parent=63 // pred_fallthru
        _
    $region64: #{cross_attention.2} parent=5 // pred_fallthru
      _
  $region6: #{cross_attention.2} parent=0 // loop_footer
    %s18 = sadd.s32 1, %s14
  $region7: #{cross_attention.2} parent=0 // loop_footer_branch
    %13 = sbr.rel target = $region3
  $region8: #{cross_attention.2} parent=0 // loop_exit
    _

</llo_original>
